<compile_context>
chip_gen: v7x
topology: tpu7x:2x2x1
jax: 0.10.0
libtpu: 0.0.40
codegen_flags: <defaults>
</compile_context>

<pallas_src>
import functools
import math

import jax
import jax.numpy as jnp
import numpy as np
from jax.experimental import pallas as pl
from jax.experimental.pallas import tpu as pltpu


def _bilinear_kernel(x_ref, wwt_ref, wh_ref, o_ref):
    """Separable bilinear upsample of a block of R channel-images.

    x_ref  : (R, H, W)            folded (N*C) rows, one block
    wwt_ref: (W, W_out)           width-pass weights (Ww^T)
    wh_ref : (H_out, H)           height-pass weights
    o_ref  : (R * H_out, W_out)   output block (row = r*H_out + h_out)
    """
    R, H, W = x_ref.shape
    H_out = wh_ref.shape[0]
    W_out = wwt_ref.shape[1]

    # Pass 1 (width): one fat MXU matmul with M = R*H rows.
    xw = jnp.dot(x_ref[...].reshape(R * H, W), wwt_ref[...],
                 preferred_element_type=jnp.float32)            # (R*H, W_out)
    xw = xw.reshape(R, H, W_out)

    # Pass 2 (height): batched matmul over the R rows (same dot_general pattern
    # as the p @ v einsum in the flash-attention reference kernel).
    wh_b = jnp.broadcast_to(wh_ref[...][None, :, :], (R, H_out, H))
    out = jnp.einsum("rah,rhw->raw", wh_b, xw,
                     preferred_element_type=jnp.float32)        # (R, H_out, W_out)

    o_ref[...] = out.reshape(R * H_out, W_out).astype(o_ref.dtype)


def _half_pixel_linear_matrix(in_size: int, out_size: int) -> np.ndarray:
    """(out_size, in_size) 1-D linear-interp matrix, PyTorch align_corners=False.

    Built with numpy at trace time (weights depend only on static shapes).
    """
    o = np.arange(out_size, dtype=np.float64)
    src = (o + 0.5) * (float(in_size) / float(out_size)) - 0.5
    src = np.maximum(src, 0.0)                      # PyTorch clamps negative coords to 0
    i0 = np.minimum(np.floor(src).astype(np.int64), in_size - 1)
    i1 = np.minimum(i0 + 1, in_size - 1)
    w1 = src - i0
    w0 = 1.0 - w1
    m = np.zeros((out_size, in_size), dtype=np.float64)
    rows = np.arange(out_size)
    m[rows, i0] += w0
    m[rows, i1] += w1                               # i0 == i1 at right edge -> weights sum to 1
    return m.astype(np.float32)


@functools.partial(jax.jit, static_argnames=("scale_factor", "mode"))
def interpolate_forward(x, *, scale_factor=2, mode="bilinear"):
    """x: (N, C, H, W). Bilinear upsample, align_corners=False (PyTorch semantics)."""
    if mode != "bilinear":
        # TODO(synk): other F.interpolate modes not implemented.
        raise NotImplementedError(f"mode={mode!r} not supported")

    N, C, H, W = x.shape
    H_out = int(math.floor(H * scale_factor))
    W_out = int(math.floor(W * scale_factor))

    # Separable interpolation weights (a few KiB vs the O((H*W)^2) kron matrix).
    # TODO(synk): cast weights (and x) to bfloat16 on v5e when exact (integer
    # scale factors) for ~2x MXU rate; kept f32 here to preserve 1e-5 tolerance.
    wh = jnp.asarray(_half_pixel_linear_matrix(H, H_out))        # (H_out, H)
    wwt = jnp.asarray(_half_pixel_linear_matrix(W, W_out).T)     # (W, W_out)

    # Fold N*C into one row dimension and tile it.
    NC = N * C
    if NC > 256:
        tile_r = 256                        # >=2 parallel blocks -> shards across v7x's 2 TCs
    else:
        tile_r = ((NC + 7) // 8) * 8        # single full-sublane block, no per-step overhead
    grid_r = (NC + tile_r - 1) // tile_r
    r_pad = grid_r * tile_r

    x_rows = x.reshape(NC, H, W)
    if r_pad != NC:
        x_rows = jnp.pad(x_rows, ((0, r_pad - NC), (0, 0), (0, 0)))

    itemsize = jnp.dtype(x.dtype).itemsize
    cost = pl.CostEstimate(
        flops=2 * NC * H * W * W_out + 2 * NC * H_out * H * W_out,
        transcendentals=0,
        bytes_accessed=(NC * H * W * itemsize
                        + NC * H_out * W_out * itemsize
                        + (W * W_out + H_out * H) * 4),
    )

    out_rows = pl.pallas_call(
        _bilinear_kernel,
        out_shape=jax.ShapeDtypeStruct((r_pad * H_out, W_out), x.dtype),
        grid_spec=pltpu.PrefetchScalarGridSpec(
            num_scalar_prefetch=0,
            grid=(grid_r,),
            in_specs=[
                pl.BlockSpec((tile_r, H, W), lambda r: (r, 0, 0)),
                pl.BlockSpec((W, W_out), lambda r: (0, 0)),   # constant tiny weights
                pl.BlockSpec((H_out, H), lambda r: (0, 0)),   # constant tiny weights
            ],
            out_specs=pl.BlockSpec((tile_r * H_out, W_out), lambda r: (r, 0)),
        ),
        compiler_params=pltpu.CompilerParams(
            dimension_semantics=("parallel",)),
        cost_estimate=cost,
    )(x_rows, wwt, wh)

    out_rows = out_rows[: NC * H_out]
    return out_rows.reshape(N, C, H_out, W_out)


if __name__ == "__main__":
    # Small shapes consistent with the module: NCHW input, scale_factor=2, bilinear.
    N, C, H, W = 2, 4, 16, 16
    scale_factor, mode = 2, "bilinear"

    key = jax.random.PRNGKey(0)
    x = jax.random.normal(key, (N, C, H, W), dtype=jnp.float32)

    out = interpolate_forward(x, scale_factor=scale_factor, mode=mode)
    out = jax.block_until_ready(out)

    # Independent reference: jax.image.resize 'bilinear' uses half-pixel centers,
    # matching PyTorch F.interpolate(..., mode='bilinear', align_corners=False)
    # for upsampling (no antialiasing difference when upscaling).
    ref = jax.image.resize(
        x, (N, C, H * scale_factor, W * scale_factor), method="bilinear")

    assert out.shape == (N, C, H * scale_factor, W * scale_factor)
    assert jnp.allclose(out, ref, atol=1e-5, rtol=1e-5), "mismatch vs reference"

    print("KERNEL_OK")
</pallas_src>

<mosaic_0001>
module attributes {stable_mosaic.version = 11 : i64} {
  func.func @_bilinear_kernel(%arg0: i32, %arg1: memref<8x16x16xf32, #tpu.memory_space<vmem>>, %arg2: memref<16x32xf32, #tpu.memory_space<vmem>>, %arg3: memref<32x16xf32, #tpu.memory_space<vmem>>, %arg4: memref<256x32xf32, #tpu.memory_space<vmem>>) attributes {dimension_semantics = [#tpu.dimension_semantics<parallel>], iteration_bounds = array<i64: 1>, scalar_prefetch = 0 : i64, scratch_operands = 0 : i64, tpu.core_type = #tpu.core_type<tc>, window_params = [{transform_indices = @transform_0, window_bounds = array<i64: 8, 16, 16>}, {pipeline_mode = #tpu.pipeline_mode<synchronous>, transform_indices = @transform_1, window_bounds = array<i64: 16, 32>}, {pipeline_mode = #tpu.pipeline_mode<synchronous>, transform_indices = @transform_2, window_bounds = array<i64: 32, 16>}, {transform_indices = @transform_3, window_bounds = array<i64: 256, 32>}]} {
    %c0 = arith.constant 0 : index
    %c0_0 = arith.constant 0 : index
    %c0_1 = arith.constant 0 : index
    %0 = vector.load %arg1[%c0, %c0_0, %c0_1] : memref<8x16x16xf32, #tpu.memory_space<vmem>>, vector<8x16x16xf32>
    %1 = vector.shape_cast %0 : vector<8x16x16xf32> to vector<128x16xf32>
    %c0_2 = arith.constant 0 : index
    %c0_3 = arith.constant 0 : index
    %2 = vector.load %arg2[%c0_2, %c0_3] : memref<16x32xf32, #tpu.memory_space<vmem>>, vector<16x32xf32>
    %cst = arith.constant dense<0.000000e+00> : vector<128x32xf32>
    %3 = tpu.matmul %1, %2, %cst {dimension_numbers = #tpu.dot_dimension_numbers<[1], [0], [0], [1], [0, 0, 1, 1], [], []>} : vector<128x16xf32>, vector<16x32xf32>, vector<128x32xf32> -> vector<128x32xf32>
    %4 = vector.shape_cast %3 : vector<128x32xf32> to vector<8x16x32xf32>
    %c0_4 = arith.constant 0 : index
    %c0_5 = arith.constant 0 : index
    %5 = vector.load %arg3[%c0_4, %c0_5] : memref<32x16xf32, #tpu.memory_space<vmem>>, vector<32x16xf32>
    %6 = vector.shape_cast %5 : vector<32x16xf32> to vector<1x32x16xf32>
    %7 = vector.shape_cast %6 : vector<1x32x16xf32> to vector<1x32x16xf32>
    %8 = vector.broadcast %7 : vector<1x32x16xf32> to vector<8x32x16xf32>
    "tpu.trace_start"() <{level = 10 : i32, message = "rah,rhw->raw"}> : () -> ()
    %cst_6 = arith.constant dense<0.000000e+00> : vector<8x32x32xf32>
    %9 = tpu.matmul %8, %4, %cst_6 {dimension_numbers = #tpu.dot_dimension_numbers<[2], [1], [1], [2], [0, 0, 0, 1, 1, 2], [0], [0]>} : vector<8x32x16xf32>, vector<8x16x32xf32>, vector<8x32x32xf32> -> vector<8x32x32xf32>
    "tpu.trace_stop"() : () -> ()
    %10 = vector.shape_cast %9 : vector<8x32x32xf32> to vector<256x32xf32>
    %c0_7 = arith.constant 0 : index
    %c0_8 = arith.constant 0 : index
    %11 = vector.load %arg4[%c0_7, %c0_8] : memref<256x32xf32, #tpu.memory_space<vmem>>, vector<256x32xf32>
    tpu.vector_store %arg4[%c0_7, %c0_8], %10 {strides = array<i32>} : memref<256x32xf32, #tpu.memory_space<vmem>>, vector<256x32xf32>,
    return
  }
  func.func @transform_0(%arg0: i32) -> (i32, i32, i32) {
    %c0_i32 = arith.constant 0 : i32
    %c0_i32_0 = arith.constant 0 : i32
    %c0_i32_1 = arith.constant 0 : i32
    return %arg0, %c0_i32, %c0_i32_0 : i32, i32, i32
  }
  func.func @transform_1(%arg0: i32) -> (i32, i32) {
    %c0_i32 = arith.constant 0 : i32
    %c0_i32_0 = arith.constant 0 : i32
    %c0_i32_1 = arith.constant 0 : i32
    return %c0_i32, %c0_i32_0 : i32, i32
  }
  func.func @transform_2(%arg0: i32) -> (i32, i32) {
    %c0_i32 = arith.constant 0 : i32
    %c0_i32_0 = arith.constant 0 : i32
    %c0_i32_1 = arith.constant 0 : i32
    return %c0_i32, %c0_i32_0 : i32, i32
  }
  func.func @transform_3(%arg0: i32) -> (i32, i32) {
    %c0_i32 = arith.constant 0 : i32
    %c0_i32_0 = arith.constant 0 : i32
    return %arg0, %c0_i32 : i32, i32
  }
}

</mosaic_0001>

<llo_original>
// kernel: interpolate_forward.1
$region0: #{interpolate_forward.1}
  #allocation0 [shape = 'u32[]', space=smem, size = 0x4, offset = 0x4, fixed_abs, tag = 'smem constant byte address 0x4 - core index']
  #allocation1 [shape = 'u32[144,128]{1,0:T(1,128)}', space=vmem, size = 0x12000, scoped, tag = 'internal scratch']
  %s0 = inlined_call_operand.hbm [shape: f32[8,16,16], index: 0, kind: input, shape index: {}]
  %s1 = inlined_call_operand.hbm [shape: f32[16,32], index: 1, kind: input, shape index: {}]
  %s2 = inlined_call_operand.hbm [shape: f32[32,16], index: 2, kind: input, shape index: {}]
  %s3 = inlined_call_operand.hbm [shape: f32[256,32], index: 3, kind: output, shape index: {}]
  %s4 = sld [smem:[#allocation0]]
  $region34: #{interpolate_forward.1} parent=0
    _
  %s6 = ssub.s32 1, %s4
  %s7 = scalar_select 0, %s6, %s4
  $region1: #{interpolate_forward.1} parent=0
    #allocation2 [shape = 'u8[65536]{0}', space=vmem, size = 0x10000, scoped, tag = 'input window, operand 0, single buffered']
    #allocation3 [shape = 's32[1]{0}', space=sflag, size = 0x4, scoped, tag = 'scoped memory for interpolate_forward.1']
    #allocation4 [shape = 's32[1]{0}', space=sflag, size = 0x4, scoped, tag = 'scoped memory for interpolate_forward.1']
    #allocation5 [shape = 'u8[8192]{0}', space=vmem, size = 0x2000, scoped, tag = 'input window, operand 1, single buffered']
    #allocation6 [shape = 's32[1]{0}', space=sflag, size = 0x4, scoped, tag = 'scoped memory for interpolate_forward.1']
    #allocation7 [shape = 'u8[16384]{0}', space=vmem, size = 0x4000, scoped, tag = 'input window, operand 2, single buffered']
    #allocation8 [shape = 'u8[131072]{0}', space=vmem, size = 0x20000, scoped, tag = 'output window, operand 0, single buffered']
    %8 = vsyncpa [#allocation3], 0
    %9 = vsyncpa [#allocation6], 0
    %10 = vsyncpa [#allocation4], 0
    // Predicated region
    $region2: #{interpolate_forward.1} parent=1 // pred_check
      _
    $region3: #{interpolate_forward.1} parent=1 // pred_check_branch
      %12 = sbr.rel (0) target = $region5
    $region4: #{interpolate_forward.1} parent=1 // pred_region
      %s14 = ssub.s32 2048, 2048
      %15 = vsyncadd [#allocation3], %s14
      %s16 = sshll.u32 [#allocation2], 4
      %s17 = int_to_ptr.vmem [resolvable:$true] %s16
      %22 = dma.hbm_to_vmem [thread:$0]  %s0, 2048, %s17, [#allocation3], 128, 128, 8
    $region5: #{interpolate_forward.1} parent=1 // pred_fallthru
      _
    // Predicated region
    $region6: #{interpolate_forward.1} parent=1 // pred_check
      _
    $region7: #{interpolate_forward.1} parent=1 // pred_check_branch
      %24 = sbr.rel (0) target = $region9
    $region8: #{interpolate_forward.1} parent=1 // pred_region
      %s26 = ssub.s32 256, 256
      %27 = vsyncadd [#allocation6], %s26
      %s28 = sshll.u32 [#allocation5], 4
      %s29 = int_to_ptr.vmem [resolvable:$true] %s28
      %34 = dma.hbm_to_vmem [thread:$0]  %s1, 256, %s29, [#allocation6], 128, 128, 8
    $region9: #{interpolate_forward.1} parent=1 // pred_fallthru
      _
    // Predicated region
    $region10: #{interpolate_forward.1} parent=1 // pred_check
      _
    $region11: #{interpolate_forward.1} parent=1 // pred_check_branch
      %36 = sbr.rel (0) target = $region13
    $region12: #{interpolate_forward.1} parent=1 // pred_region
      %s38 = ssub.s32 512, 512
      %39 = vsyncadd [#allocation6], %s38
      %s40 = sshll.u32 [#allocation7], 4
      %s41 = int_to_ptr.vmem [resolvable:$true] %s40
      %46 = dma.hbm_to_vmem [thread:$0]  %s2, 512, %s41, [#allocation6], 128, 128, 8
    $region13: #{interpolate_forward.1} parent=1 // pred_fallthru
      _
    // Predicated region
    $region14: #{interpolate_forward.1} parent=1 // pred_check
      _
    $region15: #{interpolate_forward.1} parent=1 // pred_check_branch
      %48 = sbr.rel (0) target = $region17
    $region16: #{interpolate_forward.1} parent=1 // pred_region
      %49 = dma.done [#allocation3], 2048
    $region17: #{interpolate_forward.1} parent=1 // pred_fallthru
      _
    // Predicated region
    $region18: #{interpolate_forward.1} parent=1 // pred_check
      _
    $region19: #{interpolate_forward.1} parent=1 // pred_check_branch
      %51 = sbr.rel (0) target = $region21
    $region20: #{interpolate_forward.1} parent=1 // pred_region
      %52 = dma.done [#allocation6], 256
    $region21: #{interpolate_forward.1} parent=1 // pred_fallthru
      _
    // Predicated region
    $region22: #{interpolate_forward.1} parent=1 // pred_check
      _
    $region23: #{interpolate_forward.1} parent=1 // pred_check_branch
      %54 = sbr.rel (0) target = $region25
    $region24: #{interpolate_forward.1} parent=1 // pred_region
      %55 = dma.done [#allocation6], 512
    $region25: #{interpolate_forward.1} parent=1 // pred_fallthru
      _
    %v56 = vld [vmem:[#allocation2] sm:$0xff]
    %v57 = vld [vmem:[#allocation2 + $0x8] sm:$0xff]
    %v58 = vld [vmem:[#allocation2 + $0x10] sm:$0xff]
    %v59 = vld [vmem:[#allocation2 + $0x18] sm:$0xff]
    %v60 = vld [vmem:[#allocation2 + $0x20] sm:$0xff]
    %v61 = vld [vmem:[#allocation2 + $0x28] sm:$0xff]
    %v62 = vld [vmem:[#allocation2 + $0x30] sm:$0xff]
    %v63 = vld [vmem:[#allocation2 + $0x38] sm:$0xff]
    %v64 = vld [vmem:[#allocation2 + $0x40] sm:$0xff]
    %v65 = vld [vmem:[#allocation2 + $0x48] sm:$0xff]
    %v66 = vld [vmem:[#allocation2 + $0x50] sm:$0xff]
    %v67 = vld [vmem:[#allocation2 + $0x58] sm:$0xff]
    %v68 = vld [vmem:[#allocation2 + $0x60] sm:$0xff]
    %v69 = vld [vmem:[#allocation2 + $0x68] sm:$0xff]
    %v70 = vld [vmem:[#allocation2 + $0x70] sm:$0xff]
    %v71 = vld [vmem:[#allocation2 + $0x78] sm:$0xff]
    %v72 = vld [vmem:[#allocation5] sm:$0xff]
    %v73 = vld [vmem:[#allocation5 + $0x8] sm:$0xff]
    %vm74 = vcmask 130048
    %v76 = vsel %vm74, %v56, 0
    %v79 = vsel %vm74, %v57, 0
    %v82 = vsel %vm74, %v58, 0
    %v85 = vsel %vm74, %v59, 0
    %v88 = vsel %vm74, %v60, 0
    %v91 = vsel %vm74, %v61, 0
    %v94 = vsel %vm74, %v62, 0
    %v97 = vsel %vm74, %v63, 0
    %v100 = vsel %vm74, %v64, 0
    %v103 = vsel %vm74, %v65, 0
    %v106 = vsel %vm74, %v66, 0
    %v109 = vsel %vm74, %v67, 0
    %v112 = vsel %vm74, %v68, 0
    %v115 = vsel %vm74, %v69, 0
    %v118 = vsel %vm74, %v70, 0
    %v121 = vsel %vm74, %v71, 0
    %123 = vmatprep.subr.mxu0 0.0
    %124 = vmatpush1.msra.mxu0 %v72
    %125 = vmatprep.subr.mxu0 0.0
    %126 = vmatpush1.msra.mxu0 %v73
    %127 = vmatprep.subr.mxu0 0.0
    %128 = vmatpush1.msra.mxu0 0.0
    %129 = vmatprep.subr.mxu0 0.0
    %130 = vmatpush1.msra.mxu0 0.0
    %131 = vmatprep.subr.mxu0 0.0
    %132 = vmatpush1.msra.mxu0 0.0
    %133 = vmatprep.subr.mxu0 0.0
    %134 = vmatpush1.msra.mxu0 0.0
    %135 = vmatprep.subr.mxu0 0.0
    %136 = vmatpush1.msra.mxu0 0.0
    %137 = vmatprep.subr.mxu0 0.0
    %138 = vmatpush1.msra.mxu0 0.0
    %139 = vmatprep.subr.mxu0 0.0
    %140 = vmatpush1.msra.mxu0 0.0
    %141 = vmatprep.subr.mxu0 0.0
    %142 = vmatpush1.msra.mxu0 0.0
    %143 = vmatprep.subr.mxu0 0.0
    %144 = vmatpush1.msra.mxu0 0.0
    %145 = vmatprep.subr.mxu0 0.0
    %146 = vmatpush1.msra.mxu0 0.0
    %147 = vmatprep.subr.mxu0 0.0
    %148 = vmatpush1.msra.mxu0 0.0
    %149 = vmatprep.subr.mxu0 0.0
    %150 = vmatpush1.msra.mxu0 0.0
    %151 = vmatprep.subr.mxu0 0.0
    %152 = vmatpush1.msra.mxu0 0.0
    %153 = vmatprep.subr.mxu0 0.0
    %154 = vmatpush1.msra.mxu0 0.0
    %155 = vmatprep.subr.mxu0 0.0
    %156 = vmatpush1.msra.mxu0 0.0
    %157 = vmatprep.subr.mxu0 0.0
    %158 = vmatpush1.msra.mxu0 0.0
    %159 = vmatprep.subr.mxu0 0.0
    %160 = vmatpush1.msra.mxu0 0.0
    %161 = vmatprep.subr.mxu0 0.0
    %162 = vmatpush1.msra.mxu0 0.0
    %163 = vmatprep.subr.mxu0 0.0
    %164 = vmatpush1.msra.mxu0 0.0
    %165 = vmatprep.subr.mxu0 0.0
    %166 = vmatpush1.msra.mxu0 0.0
    %167 = vmatprep.subr.mxu0 0.0
    %168 = vmatpush1.msra.mxu0 0.0
    %169 = vmatprep.subr.mxu0 0.0
    %170 = vmatpush1.msra.mxu0 0.0
    %171 = vmatprep.subr.mxu0 0.0
    %172 = vmatpush1.msra.mxu0 0.0
    %173 = vmatprep.subr.mxu0 0.0
    %174 = vmatpush1.msra.mxu0 0.0
    %175 = vmatprep.subr.mxu0 0.0
    %176 = vmatpush1.msra.mxu0 0.0
    %177 = vmatprep.subr.mxu0 0.0
    %178 = vmatpush1.msra.mxu0 0.0
    %179 = vmatprep.subr.mxu0 0.0
    %180 = vmatpush1.msra.mxu0 0.0
    %181 = vmatprep.subr.mxu0 0.0
    %182 = vmatpush1.msra.mxu0 0.0
    %183 = vmatprep.subr.mxu0 0.0
    %184 = vmatpush1.msra.mxu0 0.0
    %185 = vmatprep.subr.mxu0 0.0
    %186 = vmatpush1.msra.mxu0 0.0
    %187 = vmatprep.mubr.f32.mxu0 0.0
    %188 = vmatmul.mubr.f32.gmra.mrb[0].mxu0 %v76
    %v189 = vpop.f32.mrb[0].mxu0
    %v190 = vadd.f32 0.0, %v189
    %v191 = vpop.f32.mrb[0].mxu0
    %192 = vmatprep.mubr.f32.mxu0 0.0
    %193 = vmatmul.mubr.f32.gmra.mrb[0].mxu0 %v79
    %v194 = vpop.f32.mrb[0].mxu0
    %v195 = vadd.f32 0.0, %v194
    %v196 = vpop.f32.mrb[0].mxu0
    %197 = vmatprep.mubr.f32.mxu0 0.0
    %198 = vmatmul.mubr.f32.gmra.mrb[0].mxu0 %v82
    %v199 = vpop.f32.mrb[0].mxu0
    %v200 = vadd.f32 0.0, %v199
    %v201 = vpop.f32.mrb[0].mxu0
    %202 = vmatprep.mubr.f32.mxu0 0.0
    %203 = vmatmul.mubr.f32.gmra.mrb[0].mxu0 %v85
    %v204 = vpop.f32.mrb[0].mxu0
    %v205 = vadd.f32 0.0, %v204
    %v206 = vpop.f32.mrb[0].mxu0
    %207 = vmatprep.mubr.f32.mxu0 0.0
    %208 = vmatmul.mubr.f32.gmra.mrb[0].mxu0 %v88
    %v209 = vpop.f32.mrb[0].mxu0
    %v210 = vadd.f32 0.0, %v209
    %v211 = vpop.f32.mrb[0].mxu0
    %212 = vmatprep.mubr.f32.mxu0 0.0
    %213 = vmatmul.mubr.f32.gmra.mrb[0].mxu0 %v91
    %v214 = vpop.f32.mrb[0].mxu0
    %v215 = vadd.f32 0.0, %v214
    %v216 = vpop.f32.mrb[0].mxu0
    %217 = vmatprep.mubr.f32.mxu0 0.0
    %218 = vmatmul.mubr.f32.gmra.mrb[0].mxu0 %v94
    %v219 = vpop.f32.mrb[0].mxu0
    %v220 = vadd.f32 0.0, %v219
    %v221 = vpop.f32.mrb[0].mxu0
    %222 = vmatprep.mubr.f32.mxu0 0.0
    %223 = vmatmul.mubr.f32.gmra.mrb[0].mxu0 %v97
    %v224 = vpop.f32.mrb[0].mxu0
    %v225 = vadd.f32 0.0, %v224
    %v226 = vpop.f32.mrb[0].mxu0
    %227 = vmatprep.mubr.f32.mxu0 0.0
    %228 = vmatmul.mubr.f32.gmra.mrb[0].mxu0 %v100
    %v229 = vpop.f32.mrb[0].mxu0
    %v230 = vadd.f32 0.0, %v229
    %v231 = vpop.f32.mrb[0].mxu0
    %232 = vmatprep.mubr.f32.mxu0 0.0
    %233 = vmatmul.mubr.f32.gmra.mrb[0].mxu0 %v103
    %v234 = vpop.f32.mrb[0].mxu0
    %v235 = vadd.f32 0.0, %v234
    %v236 = vpop.f32.mrb[0].mxu0
    %237 = vmatprep.mubr.f32.mxu0 0.0
    %238 = vmatmul.mubr.f32.gmra.mrb[0].mxu0 %v106
    %v239 = vpop.f32.mrb[0].mxu0
    %v240 = vadd.f32 0.0, %v239
    %v241 = vpop.f32.mrb[0].mxu0
    %242 = vmatprep.mubr.f32.mxu0 0.0
    %243 = vmatmul.mubr.f32.gmra.mrb[0].mxu0 %v109
    %v244 = vpop.f32.mrb[0].mxu0
    %v245 = vadd.f32 0.0, %v244
    %v246 = vpop.f32.mrb[0].mxu0
    %247 = vmatprep.mubr.f32.mxu0 0.0
    %248 = vmatmul.mubr.f32.gmra.mrb[0].mxu0 %v112
    %v249 = vpop.f32.mrb[0].mxu0
    %v250 = vadd.f32 0.0, %v249
    %v251 = vpop.f32.mrb[0].mxu0
    %252 = vmatprep.mubr.f32.mxu0 0.0
    %253 = vmatmul.mubr.f32.gmra.mrb[0].mxu0 %v115
    %v254 = vpop.f32.mrb[0].mxu0
    %v255 = vadd.f32 0.0, %v254
    %v256 = vpop.f32.mrb[0].mxu0
    %257 = vmatprep.mubr.f32.mxu0 0.0
    %258 = vmatmul.mubr.f32.gmra.mrb[0].mxu0 %v118
    %v259 = vpop.f32.mrb[0].mxu0
    %v260 = vadd.f32 0.0, %v259
    %v261 = vpop.f32.mrb[0].mxu0
    %262 = vmatprep.mubr.f32.mxu0 0.0
    %263 = vmatmul.mubr.f32.gmra.mrb[0].mxu0 %v121
    %v264 = vpop.f32.mrb[0].mxu0
    %v265 = vadd.f32 0.0, %v264
    %v266 = vpop.f32.mrb[0].mxu0
    %267 = vdwg.mxu0
    %v268 = vld [vmem:[#allocation7] sm:$0xff]
    %v269 = vld [vmem:[#allocation7 + $0x8] sm:$0xff]
    %v270 = vld [vmem:[#allocation7 + $0x10] sm:$0xff]
    %v271 = vld [vmem:[#allocation7 + $0x18] sm:$0xff]
    %v273 = vsel %vm74, %v268, 0
    %v276 = vsel %vm74, %v269, 0
    %v279 = vsel %vm74, %v270, 0
    %v282 = vsel %vm74, %v271, 0
    %284 = vmatprep.subr.mxu0 0.0
    %285 = vmatpush1.msra.mxu0 %v190
    %286 = vmatprep.subr.mxu0 0.0
    %287 = vmatpush1.msra.mxu0 %v195
    %288 = vmatprep.subr.mxu0 0.0
    %289 = vmatpush1.msra.mxu0 0.0
    %290 = vmatprep.subr.mxu0 0.0
    %291 = vmatpush1.msra.mxu0 0.0
    %292 = vmatprep.subr.mxu0 0.0
    %293 = vmatpush1.msra.mxu0 0.0
    %294 = vmatprep.subr.mxu0 0.0
    %295 = vmatpush1.msra.mxu0 0.0
    %296 = vmatprep.subr.mxu0 0.0
    %297 = vmatpush1.msra.mxu0 0.0
    %298 = vmatprep.subr.mxu0 0.0
    %299 = vmatpush1.msra.mxu0 0.0
    %300 = vmatprep.subr.mxu0 0.0
    %301 = vmatpush1.msra.mxu0 0.0
    %302 = vmatprep.subr.mxu0 0.0
    %303 = vmatpush1.msra.mxu0 0.0
    %304 = vmatprep.subr.mxu0 0.0
    %305 = vmatpush1.msra.mxu0 0.0
    %306 = vmatprep.subr.mxu0 0.0
    %307 = vmatpush1.msra.mxu0 0.0
    %308 = vmatprep.subr.mxu0 0.0
    %309 = vmatpush1.msra.mxu0 0.0
    %310 = vmatprep.subr.mxu0 0.0
    %311 = vmatpush1.msra.mxu0 0.0
    %312 = vmatprep.subr.mxu0 0.0
    %313 = vmatpush1.msra.mxu0 0.0
    %314 = vmatprep.subr.mxu0 0.0
    %315 = vmatpush1.msra.mxu0 0.0
    %316 = vmatprep.subr.mxu0 0.0
    %317 = vmatpush1.msra.mxu0 0.0
    %318 = vmatprep.subr.mxu0 0.0
    %319 = vmatpush1.msra.mxu0 0.0
    %320 = vmatprep.subr.mxu0 0.0
    %321 = vmatpush1.msra.mxu0 0.0
    %322 = vmatprep.subr.mxu0 0.0
    %323 = vmatpush1.msra.mxu0 0.0
    %324 = vmatprep.subr.mxu0 0.0
    %325 = vmatpush1.msra.mxu0 0.0
    %326 = vmatprep.subr.mxu0 0.0
    %327 = vmatpush1.msra.mxu0 0.0
    %328 = vmatprep.subr.mxu0 0.0
    %329 = vmatpush1.msra.mxu0 0.0
    %330 = vmatprep.subr.mxu0 0.0
    %331 = vmatpush1.msra.mxu0 0.0
    %332 = vmatprep.subr.mxu0 0.0
    %333 = vmatpush1.msra.mxu0 0.0
    %334 = vmatprep.subr.mxu0 0.0
    %335 = vmatpush1.msra.mxu0 0.0
    %336 = vmatprep.subr.mxu0 0.0
    %337 = vmatpush1.msra.mxu0 0.0
    %338 = vmatprep.subr.mxu0 0.0
    %339 = vmatpush1.msra.mxu0 0.0
    %340 = vmatprep.subr.mxu0 0.0
    %341 = vmatpush1.msra.mxu0 0.0
    %342 = vmatprep.subr.mxu0 0.0
    %343 = vmatpush1.msra.mxu0 0.0
    %344 = vmatprep.subr.mxu0 0.0
    %345 = vmatpush1.msra.mxu0 0.0
    %346 = vmatprep.subr.mxu0 0.0
    %347 = vmatpush1.msra.mxu0 0.0
    %348 = vmatprep.mubr.f32.mxu0 0.0
    %349 = vmatmul.mubr.f32.gmra.mrb[0].mxu0 %v273
    %v350 = vpop.f32.mrb[0].mxu0
    %v351 = vadd.f32 0.0, %v350
    %v352 = vpop.f32.mrb[0].mxu0
    %353 = vmatprep.mubr.f32.mxu0 0.0
    %354 = vmatmul.mubr.f32.gmra.mrb[0].mxu0 %v276
    %v355 = vpop.f32.mrb[0].mxu0
    %v356 = vadd.f32 0.0, %v355
    %v357 = vpop.f32.mrb[0].mxu0
    %358 = vmatprep.mubr.f32.mxu0 0.0
    %359 = vmatmul.mubr.f32.gmra.mrb[0].mxu0 %v279
    %v360 = vpop.f32.mrb[0].mxu0
    %v361 = vadd.f32 0.0, %v360
    %v362 = vpop.f32.mrb[0].mxu0
    %363 = vmatprep.mubr.f32.mxu0 0.0
    %364 = vmatmul.mubr.f32.gmra.mrb[0].mxu0 %v282
    %v365 = vpop.f32.mrb[0].mxu0
    %v366 = vadd.f32 0.0, %v365
    %v367 = vpop.f32.mrb[0].mxu0
    %368 = vdwg.mxu0
    %369 = vmatprep.subr.mxu0 0.0
    %370 = vmatpush1.msra.mxu0 %v200
    %371 = vmatprep.subr.mxu0 0.0
    %372 = vmatpush1.msra.mxu0 %v205
    %373 = vmatprep.subr.mxu0 0.0
    %374 = vmatpush1.msra.mxu0 0.0
    %375 = vmatprep.subr.mxu0 0.0
    %376 = vmatpush1.msra.mxu0 0.0
    %377 = vmatprep.subr.mxu0 0.0
    %378 = vmatpush1.msra.mxu0 0.0
    %379 = vmatprep.subr.mxu0 0.0
    %380 = vmatpush1.msra.mxu0 0.0
    %381 = vmatprep.subr.mxu0 0.0
    %382 = vmatpush1.msra.mxu0 0.0
    %383 = vmatprep.subr.mxu0 0.0
    %384 = vmatpush1.msra.mxu0 0.0
    %385 = vmatprep.subr.mxu0 0.0
    %386 = vmatpush1.msra.mxu0 0.0
    %387 = vmatprep.subr.mxu0 0.0
    %388 = vmatpush1.msra.mxu0 0.0
    %389 = vmatprep.subr.mxu0 0.0
    %390 = vmatpush1.msra.mxu0 0.0
    %391 = vmatprep.subr.mxu0 0.0
    %392 = vmatpush1.msra.mxu0 0.0
    %393 = vmatprep.subr.mxu0 0.0
    %394 = vmatpush1.msra.mxu0 0.0
    %395 = vmatprep.subr.mxu0 0.0
    %396 = vmatpush1.msra.mxu0 0.0
    %397 = vmatprep.subr.mxu0 0.0
    %398 = vmatpush1.msra.mxu0 0.0
    %399 = vmatprep.subr.mxu0 0.0
    %400 = vmatpush1.msra.mxu0 0.0
    %401 = vmatprep.subr.mxu0 0.0
    %402 = vmatpush1.msra.mxu0 0.0
    %403 = vmatprep.subr.mxu0 0.0
    %404 = vmatpush1.msra.mxu0 0.0
    %405 = vmatprep.subr.mxu0 0.0
    %406 = vmatpush1.msra.mxu0 0.0
    %407 = vmatprep.subr.mxu0 0.0
    %408 = vmatpush1.msra.mxu0 0.0
    %409 = vmatprep.subr.mxu0 0.0
    %410 = vmatpush1.msra.mxu0 0.0
    %411 = vmatprep.subr.mxu0 0.0
    %412 = vmatpush1.msra.mxu0 0.0
    %413 = vmatprep.subr.mxu0 0.0
    %414 = vmatpush1.msra.mxu0 0.0
    %415 = vmatprep.subr.mxu0 0.0
    %416 = vmatpush1.msra.mxu0 0.0
    %417 = vmatprep.subr.mxu0 0.0
    %418 = vmatpush1.msra.mxu0 0.0
    %419 = vmatprep.subr.mxu0 0.0
    %420 = vmatpush1.msra.mxu0 0.0
    %421 = vmatprep.subr.mxu0 0.0
    %422 = vmatpush1.msra.mxu0 0.0
    %423 = vmatprep.subr.mxu0 0.0
    %424 = vmatpush1.msra.mxu0 0.0
    %425 = vmatprep.subr.mxu0 0.0
    %426 = vmatpush1.msra.mxu0 0.0
    %427 = vmatprep.subr.mxu0 0.0
    %428 = vmatpush1.msra.mxu0 0.0
    %429 = vmatprep.subr.mxu0 0.0
    %430 = vmatpush1.msra.mxu0 0.0
    %431 = vmatprep.subr.mxu0 0.0
    %432 = vmatpush1.msra.mxu0 0.0
    %433 = vmatprep.mubr.f32.mxu0 0.0
    %434 = vmatmul.mubr.f32.gmra.mrb[0].mxu0 %v273
    %v435 = vpop.f32.mrb[0].mxu0
    %v436 = vadd.f32 0.0, %v435
    %v437 = vpop.f32.mrb[0].mxu0
    %438 = vmatprep.mubr.f32.mxu0 0.0
    %439 = vmatmul.mubr.f32.gmra.mrb[0].mxu0 %v276
    %v440 = vpop.f32.mrb[0].mxu0
    %v441 = vadd.f32 0.0, %v440
    %v442 = vpop.f32.mrb[0].mxu0
    %443 = vmatprep.mubr.f32.mxu0 0.0
    %444 = vmatmul.mubr.f32.gmra.mrb[0].mxu0 %v279
    %v445 = vpop.f32.mrb[0].mxu0
    %v446 = vadd.f32 0.0, %v445
    %v447 = vpop.f32.mrb[0].mxu0
    %448 = vmatprep.mubr.f32.mxu0 0.0
    %449 = vmatmul.mubr.f32.gmra.mrb[0].mxu0 %v282
    %v450 = vpop.f32.mrb[0].mxu0
    %v451 = vadd.f32 0.0, %v450
    %v452 = vpop.f32.mrb[0].mxu0
    %453 = vdwg.mxu0
    %454 = vmatprep.subr.mxu0 0.0
    %455 = vmatpush1.msra.mxu0 %v210
    %456 = vmatprep.subr.mxu0 0.0
    %457 = vmatpush1.msra.mxu0 %v215
    %458 = vmatprep.subr.mxu0 0.0
    %459 = vmatpush1.msra.mxu0 0.0
    %460 = vmatprep.subr.mxu0 0.0
    %461 = vmatpush1.msra.mxu0 0.0
    %462 = vmatprep.subr.mxu0 0.0
    %463 = vmatpush1.msra.mxu0 0.0
    %464 = vmatprep.subr.mxu0 0.0
    %465 = vmatpush1.msra.mxu0 0.0
    %466 = vmatprep.subr.mxu0 0.0
    %467 = vmatpush1.msra.mxu0 0.0
    %468 = vmatprep.subr.mxu0 0.0
    %469 = vmatpush1.msra.mxu0 0.0
    %470 = vmatprep.subr.mxu0 0.0
    %471 = vmatpush1.msra.mxu0 0.0
    %472 = vmatprep.subr.mxu0 0.0
    %473 = vmatpush1.msra.mxu0 0.0
    %474 = vmatprep.subr.mxu0 0.0
    %475 = vmatpush1.msra.mxu0 0.0
    %476 = vmatprep.subr.mxu0 0.0
    %477 = vmatpush1.msra.mxu0 0.0
    %478 = vmatprep.subr.mxu0 0.0
    %479 = vmatpush1.msra.mxu0 0.0
    %480 = vmatprep.subr.mxu0 0.0
    %481 = vmatpush1.msra.mxu0 0.0
    %482 = vmatprep.subr.mxu0 0.0
    %483 = vmatpush1.msra.mxu0 0.0
    %484 = vmatprep.subr.mxu0 0.0
    %485 = vmatpush1.msra.mxu0 0.0
    %486 = vmatprep.subr.mxu0 0.0
    %487 = vmatpush1.msra.mxu0 0.0
    %488 = vmatprep.subr.mxu0 0.0
    %489 = vmatpush1.msra.mxu0 0.0
    %490 = vmatprep.subr.mxu0 0.0
    %491 = vmatpush1.msra.mxu0 0.0
    %492 = vmatprep.subr.mxu0 0.0
    %493 = vmatpush1.msra.mxu0 0.0
    %494 = vmatprep.subr.mxu0 0.0
    %495 = vmatpush1.msra.mxu0 0.0
    %496 = vmatprep.subr.mxu0 0.0
    %497 = vmatpush1.msra.mxu0 0.0
    %498 = vmatprep.subr.mxu0 0.0
    %499 = vmatpush1.msra.mxu0 0.0
    %500 = vmatprep.subr.mxu0 0.0
    %501 = vmatpush1.msra.mxu0 0.0
    %502 = vmatprep.subr.mxu0 0.0
    %503 = vmatpush1.msra.mxu0 0.0
    %504 = vmatprep.subr.mxu0 0.0
    %505 = vmatpush1.msra.mxu0 0.0
    %506 = vmatprep.subr.mxu0 0.0
    %507 = vmatpush1.msra.mxu0 0.0
    %508 = vmatprep.subr.mxu0 0.0
    %509 = vmatpush1.msra.mxu0 0.0
    %510 = vmatprep.subr.mxu0 0.0
    %511 = vmatpush1.msra.mxu0 0.0
    %512 = vmatprep.subr.mxu0 0.0
    %513 = vmatpush1.msra.mxu0 0.0
    %514 = vmatprep.subr.mxu0 0.0
    %515 = vmatpush1.msra.mxu0 0.0
    %516 = vmatprep.subr.mxu0 0.0
    %517 = vmatpush1.msra.mxu0 0.0
    %518 = vmatprep.mubr.f32.mxu0 0.0
    %519 = vmatmul.mubr.f32.gmra.mrb[0].mxu0 %v273
    %v520 = vpop.f32.mrb[0].mxu0
    %v521 = vadd.f32 0.0, %v520
    %v522 = vpop.f32.mrb[0].mxu0
    %523 = vmatprep.mubr.f32.mxu0 0.0
    %524 = vmatmul.mubr.f32.gmra.mrb[0].mxu0 %v276
    %v525 = vpop.f32.mrb[0].mxu0
    %v526 = vadd.f32 0.0, %v525
    %v527 = vpop.f32.mrb[0].mxu0
    %528 = vmatprep.mubr.f32.mxu0 0.0
    %529 = vmatmul.mubr.f32.gmra.mrb[0].mxu0 %v279
    %v530 = vpop.f32.mrb[0].mxu0
    %v531 = vadd.f32 0.0, %v530
    %v532 = vpop.f32.mrb[0].mxu0
    %533 = vmatprep.mubr.f32.mxu0 0.0
    %534 = vmatmul.mubr.f32.gmra.mrb[0].mxu0 %v282
    %v535 = vpop.f32.mrb[0].mxu0
    %v536 = vadd.f32 0.0, %v535
    %v537 = vpop.f32.mrb[0].mxu0
    %538 = vdwg.mxu0
    %539 = vmatprep.subr.mxu0 0.0
    %540 = vmatpush1.msra.mxu0 %v220
    %541 = vmatprep.subr.mxu0 0.0
    %542 = vmatpush1.msra.mxu0 %v225
    %543 = vmatprep.subr.mxu0 0.0
    %544 = vmatpush1.msra.mxu0 0.0
    %545 = vmatprep.subr.mxu0 0.0
    %546 = vmatpush1.msra.mxu0 0.0
    %547 = vmatprep.subr.mxu0 0.0
    %548 = vmatpush1.msra.mxu0 0.0
    %549 = vmatprep.subr.mxu0 0.0
    %550 = vmatpush1.msra.mxu0 0.0
    %551 = vmatprep.subr.mxu0 0.0
    %552 = vmatpush1.msra.mxu0 0.0
    %553 = vmatprep.subr.mxu0 0.0
    %554 = vmatpush1.msra.mxu0 0.0
    %555 = vmatprep.subr.mxu0 0.0
    %556 = vmatpush1.msra.mxu0 0.0
    %557 = vmatprep.subr.mxu0 0.0
    %558 = vmatpush1.msra.mxu0 0.0
    %559 = vmatprep.subr.mxu0 0.0
    %560 = vmatpush1.msra.mxu0 0.0
    %561 = vmatprep.subr.mxu0 0.0
    %562 = vmatpush1.msra.mxu0 0.0
    %563 = vmatprep.subr.mxu0 0.0
    %564 = vmatpush1.msra.mxu0 0.0
    %565 = vmatprep.subr.mxu0 0.0
    %566 = vmatpush1.msra.mxu0 0.0
    %567 = vmatprep.subr.mxu0 0.0
    %568 = vmatpush1.msra.mxu0 0.0
    %569 = vmatprep.subr.mxu0 0.0
    %570 = vmatpush1.msra.mxu0 0.0
    %571 = vmatprep.subr.mxu0 0.0
    %572 = vmatpush1.msra.mxu0 0.0
    %573 = vmatprep.subr.mxu0 0.0
    %574 = vmatpush1.msra.mxu0 0.0
    %575 = vmatprep.subr.mxu0 0.0
    %576 = vmatpush1.msra.mxu0 0.0
    %577 = vmatprep.subr.mxu0 0.0
    %578 = vmatpush1.msra.mxu0 0.0
    %579 = vmatprep.subr.mxu0 0.0
    %580 = vmatpush1.msra.mxu0 0.0
    %581 = vmatprep.subr.mxu0 0.0
    %582 = vmatpush1.msra.mxu0 0.0
    %583 = vmatprep.subr.mxu0 0.0
    %584 = vmatpush1.msra.mxu0 0.0
    %585 = vmatprep.subr.mxu0 0.0
    %586 = vmatpush1.msra.mxu0 0.0
    %587 = vmatprep.subr.mxu0 0.0
    %588 = vmatpush1.msra.mxu0 0.0
    %589 = vmatprep.subr.mxu0 0.0
    %590 = vmatpush1.msra.mxu0 0.0
    %591 = vmatprep.subr.mxu0 0.0
    %592 = vmatpush1.msra.mxu0 0.0
    %593 = vmatprep.subr.mxu0 0.0
    %594 = vmatpush1.msra.mxu0 0.0
    %595 = vmatprep.subr.mxu0 0.0
    %596 = vmatpush1.msra.mxu0 0.0
    %597 = vmatprep.subr.mxu0 0.0
    %598 = vmatpush1.msra.mxu0 0.0
    %599 = vmatprep.subr.mxu0 0.0
    %600 = vmatpush1.msra.mxu0 0.0
    %601 = vmatprep.subr.mxu0 0.0
    %602 = vmatpush1.msra.mxu0 0.0
    %603 = vmatprep.mubr.f32.mxu0 0.0
    %604 = vmatmul.mubr.f32.gmra.mrb[0].mxu0 %v273
    %v605 = vpop.f32.mrb[0].mxu0
    %v606 = vadd.f32 0.0, %v605
    %v607 = vpop.f32.mrb[0].mxu0
    %608 = vmatprep.mubr.f32.mxu0 0.0
    %609 = vmatmul.mubr.f32.gmra.mrb[0].mxu0 %v276
    %v610 = vpop.f32.mrb[0].mxu0
    %v611 = vadd.f32 0.0, %v610
    %v612 = vpop.f32.mrb[0].mxu0
    %613 = vmatprep.mubr.f32.mxu0 0.0
    %614 = vmatmul.mubr.f32.gmra.mrb[0].mxu0 %v279
    %v615 = vpop.f32.mrb[0].mxu0
    %v616 = vadd.f32 0.0, %v615
    %v617 = vpop.f32.mrb[0].mxu0
    %618 = vmatprep.mubr.f32.mxu0 0.0
    %619 = vmatmul.mubr.f32.gmra.mrb[0].mxu0 %v282
    %v620 = vpop.f32.mrb[0].mxu0
    %v621 = vadd.f32 0.0, %v620
    %v622 = vpop.f32.mrb[0].mxu0
    %623 = vdwg.mxu0
    %624 = vmatprep.subr.mxu0 0.0
    %625 = vmatpush1.msra.mxu0 %v230
    %626 = vmatprep.subr.mxu0 0.0
    %627 = vmatpush1.msra.mxu0 %v235
    %628 = vmatprep.subr.mxu0 0.0
    %629 = vmatpush1.msra.mxu0 0.0
    %630 = vmatprep.subr.mxu0 0.0
    %631 = vmatpush1.msra.mxu0 0.0
    %632 = vmatprep.subr.mxu0 0.0
    %633 = vmatpush1.msra.mxu0 0.0
    %634 = vmatprep.subr.mxu0 0.0
    %635 = vmatpush1.msra.mxu0 0.0
    %636 = vmatprep.subr.mxu0 0.0
    %637 = vmatpush1.msra.mxu0 0.0
    %638 = vmatprep.subr.mxu0 0.0
    %639 = vmatpush1.msra.mxu0 0.0
    %640 = vmatprep.subr.mxu0 0.0
    %641 = vmatpush1.msra.mxu0 0.0
    %642 = vmatprep.subr.mxu0 0.0
    %643 = vmatpush1.msra.mxu0 0.0
    %644 = vmatprep.subr.mxu0 0.0
    %645 = vmatpush1.msra.mxu0 0.0
    %646 = vmatprep.subr.mxu0 0.0
    %647 = vmatpush1.msra.mxu0 0.0
    %648 = vmatprep.subr.mxu0 0.0
    %649 = vmatpush1.msra.mxu0 0.0
    %650 = vmatprep.subr.mxu0 0.0
    %651 = vmatpush1.msra.mxu0 0.0
    %652 = vmatprep.subr.mxu0 0.0
    %653 = vmatpush1.msra.mxu0 0.0
    %654 = vmatprep.subr.mxu0 0.0
    %655 = vmatpush1.msra.mxu0 0.0
    %656 = vmatprep.subr.mxu0 0.0
    %657 = vmatpush1.msra.mxu0 0.0
    %658 = vmatprep.subr.mxu0 0.0
    %659 = vmatpush1.msra.mxu0 0.0
    %660 = vmatprep.subr.mxu0 0.0
    %661 = vmatpush1.msra.mxu0 0.0
    %662 = vmatprep.subr.mxu0 0.0
    %663 = vmatpush1.msra.mxu0 0.0
    %664 = vmatprep.subr.mxu0 0.0
    %665 = vmatpush1.msra.mxu0 0.0
    %666 = vmatprep.subr.mxu0 0.0
    %667 = vmatpush1.msra.mxu0 0.0
    %668 = vmatprep.subr.mxu0 0.0
    %669 = vmatpush1.msra.mxu0 0.0
    %670 = vmatprep.subr.mxu0 0.0
    %671 = vmatpush1.msra.mxu0 0.0
    %672 = vmatprep.subr.mxu0 0.0
    %673 = vmatpush1.msra.mxu0 0.0
    %674 = vmatprep.subr.mxu0 0.0
    %675 = vmatpush1.msra.mxu0 0.0
    %676 = vmatprep.subr.mxu0 0.0
    %677 = vmatpush1.msra.mxu0 0.0
    %678 = vmatprep.subr.mxu0 0.0
    %679 = vmatpush1.msra.mxu0 0.0
    %680 = vmatprep.subr.mxu0 0.0
    %681 = vmatpush1.msra.mxu0 0.0
    %682 = vmatprep.subr.mxu0 0.0
    %683 = vmatpush1.msra.mxu0 0.0
    %684 = vmatprep.subr.mxu0 0.0
    %685 = vmatpush1.msra.mxu0 0.0
    %686 = vmatprep.subr.mxu0 0.0
    %687 = vmatpush1.msra.mxu0 0.0
    %688 = vmatprep.mubr.f32.mxu0 0.0
    %689 = vmatmul.mubr.f32.gmra.mrb[0].mxu0 %v273
    %v690 = vpop.f32.mrb[0].mxu0
    %v691 = vadd.f32 0.0, %v690
    %v692 = vpop.f32.mrb[0].mxu0
    %693 = vmatprep.mubr.f32.mxu0 0.0
    %694 = vmatmul.mubr.f32.gmra.mrb[0].mxu0 %v276
    %v695 = vpop.f32.mrb[0].mxu0
    %v696 = vadd.f32 0.0, %v695
    %v697 = vpop.f32.mrb[0].mxu0
    %698 = vmatprep.mubr.f32.mxu0 0.0
    %699 = vmatmul.mubr.f32.gmra.mrb[0].mxu0 %v279
    %v700 = vpop.f32.mrb[0].mxu0
    %v701 = vadd.f32 0.0, %v700
    %v702 = vpop.f32.mrb[0].mxu0
    %703 = vmatprep.mubr.f32.mxu0 0.0
    %704 = vmatmul.mubr.f32.gmra.mrb[0].mxu0 %v282
    %v705 = vpop.f32.mrb[0].mxu0
    %v706 = vadd.f32 0.0, %v705
    %v707 = vpop.f32.mrb[0].mxu0
    %708 = vdwg.mxu0
    %709 = vmatprep.subr.mxu0 0.0
    %710 = vmatpush1.msra.mxu0 %v240
    %711 = vmatprep.subr.mxu0 0.0
    %712 = vmatpush1.msra.mxu0 %v245
    %713 = vmatprep.subr.mxu0 0.0
    %714 = vmatpush1.msra.mxu0 0.0
    %715 = vmatprep.subr.mxu0 0.0
    %716 = vmatpush1.msra.mxu0 0.0
    %717 = vmatprep.subr.mxu0 0.0
    %718 = vmatpush1.msra.mxu0 0.0
    %719 = vmatprep.subr.mxu0 0.0
    %720 = vmatpush1.msra.mxu0 0.0
    %721 = vmatprep.subr.mxu0 0.0
    %722 = vmatpush1.msra.mxu0 0.0
    %723 = vmatprep.subr.mxu0 0.0
    %724 = vmatpush1.msra.mxu0 0.0
    %725 = vmatprep.subr.mxu0 0.0
    %726 = vmatpush1.msra.mxu0 0.0
    %727 = vmatprep.subr.mxu0 0.0
    %728 = vmatpush1.msra.mxu0 0.0
    %729 = vmatprep.subr.mxu0 0.0
    %730 = vmatpush1.msra.mxu0 0.0
    %731 = vmatprep.subr.mxu0 0.0
    %732 = vmatpush1.msra.mxu0 0.0
    %733 = vmatprep.subr.mxu0 0.0
    %734 = vmatpush1.msra.mxu0 0.0
    %735 = vmatprep.subr.mxu0 0.0
    %736 = vmatpush1.msra.mxu0 0.0
    %737 = vmatprep.subr.mxu0 0.0
    %738 = vmatpush1.msra.mxu0 0.0
    %739 = vmatprep.subr.mxu0 0.0
    %740 = vmatpush1.msra.mxu0 0.0
    %741 = vmatprep.subr.mxu0 0.0
    %742 = vmatpush1.msra.mxu0 0.0
    %743 = vmatprep.subr.mxu0 0.0
    %744 = vmatpush1.msra.mxu0 0.0
    %745 = vmatprep.subr.mxu0 0.0
    %746 = vmatpush1.msra.mxu0 0.0
    %747 = vmatprep.subr.mxu0 0.0
    %748 = vmatpush1.msra.mxu0 0.0
    %749 = vmatprep.subr.mxu0 0.0
    %750 = vmatpush1.msra.mxu0 0.0
    %751 = vmatprep.subr.mxu0 0.0
    %752 = vmatpush1.msra.mxu0 0.0
    %753 = vmatprep.subr.mxu0 0.0
    %754 = vmatpush1.msra.mxu0 0.0
    %755 = vmatprep.subr.mxu0 0.0
    %756 = vmatpush1.msra.mxu0 0.0
    %757 = vmatprep.subr.mxu0 0.0
    %758 = vmatpush1.msra.mxu0 0.0
    %759 = vmatprep.subr.mxu0 0.0
    %760 = vmatpush1.msra.mxu0 0.0
    %761 = vmatprep.subr.mxu0 0.0
    %762 = vmatpush1.msra.mxu0 0.0
    %763 = vmatprep.subr.mxu0 0.0
    %764 = vmatpush1.msra.mxu0 0.0
    %765 = vmatprep.subr.mxu0 0.0
    %766 = vmatpush1.msra.mxu0 0.0
    %767 = vmatprep.subr.mxu0 0.0
    %768 = vmatpush1.msra.mxu0 0.0
    %769 = vmatprep.subr.mxu0 0.0
    %770 = vmatpush1.msra.mxu0 0.0
    %771 = vmatprep.subr.mxu0 0.0
    %772 = vmatpush1.msra.mxu0 0.0
    %773 = vmatprep.mubr.f32.mxu0 0.0
    %774 = vmatmul.mubr.f32.gmra.mrb[0].mxu0 %v273
    %v775 = vpop.f32.mrb[0].mxu0
    %v776 = vadd.f32 0.0, %v775
    %v777 = vpop.f32.mrb[0].mxu0
    %778 = vmatprep.mubr.f32.mxu0 0.0
    %779 = vmatmul.mubr.f32.gmra.mrb[0].mxu0 %v276
    %v780 = vpop.f32.mrb[0].mxu0
    %v781 = vadd.f32 0.0, %v780
    %v782 = vpop.f32.mrb[0].mxu0
    %783 = vmatprep.mubr.f32.mxu0 0.0
    %784 = vmatmul.mubr.f32.gmra.mrb[0].mxu0 %v279
    %v785 = vpop.f32.mrb[0].mxu0
    %v786 = vadd.f32 0.0, %v785
    %v787 = vpop.f32.mrb[0].mxu0
    %788 = vmatprep.mubr.f32.mxu0 0.0
    %789 = vmatmul.mubr.f32.gmra.mrb[0].mxu0 %v282
    %v790 = vpop.f32.mrb[0].mxu0
    %v791 = vadd.f32 0.0, %v790
    %v792 = vpop.f32.mrb[0].mxu0
    %793 = vdwg.mxu0
    %794 = vmatprep.subr.mxu0 0.0
    %795 = vmatpush1.msra.mxu0 %v250
    %796 = vmatprep.subr.mxu0 0.0
    %797 = vmatpush1.msra.mxu0 %v255
    %798 = vmatprep.subr.mxu0 0.0
    %799 = vmatpush1.msra.mxu0 0.0
    %800 = vmatprep.subr.mxu0 0.0
    %801 = vmatpush1.msra.mxu0 0.0
    %802 = vmatprep.subr.mxu0 0.0
    %803 = vmatpush1.msra.mxu0 0.0
    %804 = vmatprep.subr.mxu0 0.0
    %805 = vmatpush1.msra.mxu0 0.0
    %806 = vmatprep.subr.mxu0 0.0
    %807 = vmatpush1.msra.mxu0 0.0
    %808 = vmatprep.subr.mxu0 0.0
    %809 = vmatpush1.msra.mxu0 0.0
    %810 = vmatprep.subr.mxu0 0.0
    %811 = vmatpush1.msra.mxu0 0.0
    %812 = vmatprep.subr.mxu0 0.0
    %813 = vmatpush1.msra.mxu0 0.0
    %814 = vmatprep.subr.mxu0 0.0
    %815 = vmatpush1.msra.mxu0 0.0
    %816 = vmatprep.subr.mxu0 0.0
    %817 = vmatpush1.msra.mxu0 0.0
    %818 = vmatprep.subr.mxu0 0.0
    %819 = vmatpush1.msra.mxu0 0.0
    %820 = vmatprep.subr.mxu0 0.0
    %821 = vmatpush1.msra.mxu0 0.0
    %822 = vmatprep.subr.mxu0 0.0
    %823 = vmatpush1.msra.mxu0 0.0
    %824 = vmatprep.subr.mxu0 0.0
    %825 = vmatpush1.msra.mxu0 0.0
    %826 = vmatprep.subr.mxu0 0.0
    %827 = vmatpush1.msra.mxu0 0.0
    %828 = vmatprep.subr.mxu0 0.0
    %829 = vmatpush1.msra.mxu0 0.0
    %830 = vmatprep.subr.mxu0 0.0
    %831 = vmatpush1.msra.mxu0 0.0
    %832 = vmatprep.subr.mxu0 0.0
    %833 = vmatpush1.msra.mxu0 0.0
    %834 = vmatprep.subr.mxu0 0.0
    %835 = vmatpush1.msra.mxu0 0.0
    %836 = vmatprep.subr.mxu0 0.0
    %837 = vmatpush1.msra.mxu0 0.0
    %838 = vmatprep.subr.mxu0 0.0
    %839 = vmatpush1.msra.mxu0 0.0
    %840 = vmatprep.subr.mxu0 0.0
    %841 = vmatpush1.msra.mxu0 0.0
    %842 = vmatprep.subr.mxu0 0.0
    %843 = vmatpush1.msra.mxu0 0.0
    %844 = vmatprep.subr.mxu0 0.0
    %845 = vmatpush1.msra.mxu0 0.0
    %846 = vmatprep.subr.mxu0 0.0
    %847 = vmatpush1.msra.mxu0 0.0
    %848 = vmatprep.subr.mxu0 0.0
    %849 = vmatpush1.msra.mxu0 0.0
    %850 = vmatprep.subr.mxu0 0.0
    %851 = vmatpush1.msra.mxu0 0.0
    %852 = vmatprep.subr.mxu0 0.0
    %853 = vmatpush1.msra.mxu0 0.0
    %854 = vmatprep.subr.mxu0 0.0
    %855 = vmatpush1.msra.mxu0 0.0
    %856 = vmatprep.subr.mxu0 0.0
    %857 = vmatpush1.msra.mxu0 0.0
    %858 = vmatprep.mubr.f32.mxu0 0.0
    %859 = vmatmul.mubr.f32.gmra.mrb[0].mxu0 %v273
    %v860 = vpop.f32.mrb[0].mxu0
    %v861 = vadd.f32 0.0, %v860
    %v862 = vpop.f32.mrb[0].mxu0
    %863 = vmatprep.mubr.f32.mxu0 0.0
    %864 = vmatmul.mubr.f32.gmra.mrb[0].mxu0 %v276
    %v865 = vpop.f32.mrb[0].mxu0
    %v866 = vadd.f32 0.0, %v865
    %v867 = vpop.f32.mrb[0].mxu0
    %868 = vmatprep.mubr.f32.mxu0 0.0
    %869 = vmatmul.mubr.f32.gmra.mrb[0].mxu0 %v279
    %v870 = vpop.f32.mrb[0].mxu0
    %v871 = vadd.f32 0.0, %v870
    %v872 = vpop.f32.mrb[0].mxu0
    %873 = vmatprep.mubr.f32.mxu0 0.0
    %874 = vmatmul.mubr.f32.gmra.mrb[0].mxu0 %v282
    %v875 = vpop.f32.mrb[0].mxu0
    %v876 = vadd.f32 0.0, %v875
    %v877 = vpop.f32.mrb[0].mxu0
    %878 = vdwg.mxu0
    %879 = vmatprep.subr.mxu0 0.0
    %880 = vmatpush1.msra.mxu0 %v260
    %881 = vmatprep.subr.mxu0 0.0
    %882 = vmatpush1.msra.mxu0 %v265
    %883 = vmatprep.subr.mxu0 0.0
    %884 = vmatpush1.msra.mxu0 0.0
    %885 = vmatprep.subr.mxu0 0.0
    %886 = vmatpush1.msra.mxu0 0.0
    %887 = vmatprep.subr.mxu0 0.0
    %888 = vmatpush1.msra.mxu0 0.0
    %889 = vmatprep.subr.mxu0 0.0
    %890 = vmatpush1.msra.mxu0 0.0
    %891 = vmatprep.subr.mxu0 0.0
    %892 = vmatpush1.msra.mxu0 0.0
    %893 = vmatprep.subr.mxu0 0.0
    %894 = vmatpush1.msra.mxu0 0.0
    %895 = vmatprep.subr.mxu0 0.0
    %896 = vmatpush1.msra.mxu0 0.0
    %897 = vmatprep.subr.mxu0 0.0
    %898 = vmatpush1.msra.mxu0 0.0
    %899 = vmatprep.subr.mxu0 0.0
    %900 = vmatpush1.msra.mxu0 0.0
    %901 = vmatprep.subr.mxu0 0.0
    %902 = vmatpush1.msra.mxu0 0.0
    %903 = vmatprep.subr.mxu0 0.0
    %904 = vmatpush1.msra.mxu0 0.0
    %905 = vmatprep.subr.mxu0 0.0
    %906 = vmatpush1.msra.mxu0 0.0
    %907 = vmatprep.subr.mxu0 0.0
    %908 = vmatpush1.msra.mxu0 0.0
    %909 = vmatprep.subr.mxu0 0.0
    %910 = vmatpush1.msra.mxu0 0.0
    %911 = vmatprep.subr.mxu0 0.0
    %912 = vmatpush1.msra.mxu0 0.0
    %913 = vmatprep.subr.mxu0 0.0
    %914 = vmatpush1.msra.mxu0 0.0
    %915 = vmatprep.subr.mxu0 0.0
    %916 = vmatpush1.msra.mxu0 0.0
    %917 = vmatprep.subr.mxu0 0.0
    %918 = vmatpush1.msra.mxu0 0.0
    %919 = vmatprep.subr.mxu0 0.0
    %920 = vmatpush1.msra.mxu0 0.0
    %921 = vmatprep.subr.mxu0 0.0
    %922 = vmatpush1.msra.mxu0 0.0
    %923 = vmatprep.subr.mxu0 0.0
    %924 = vmatpush1.msra.mxu0 0.0
    %925 = vmatprep.subr.mxu0 0.0
    %926 = vmatpush1.msra.mxu0 0.0
    %927 = vmatprep.subr.mxu0 0.0
    %928 = vmatpush1.msra.mxu0 0.0
    %929 = vmatprep.subr.mxu0 0.0
    %930 = vmatpush1.msra.mxu0 0.0
    %931 = vmatprep.subr.mxu0 0.0
    %932 = vmatpush1.msra.mxu0 0.0
    %933 = vmatprep.subr.mxu0 0.0
    %934 = vmatpush1.msra.mxu0 0.0
    %935 = vmatprep.subr.mxu0 0.0
    %936 = vmatpush1.msra.mxu0 0.0
    %937 = vmatprep.subr.mxu0 0.0
    %938 = vmatpush1.msra.mxu0 0.0
    %939 = vmatprep.subr.mxu0 0.0
    %940 = vmatpush1.msra.mxu0 0.0
    %941 = vmatprep.subr.mxu0 0.0
    %942 = vmatpush1.msra.mxu0 0.0
    %943 = vmatprep.mubr.f32.mxu0 0.0
    %944 = vmatmul.mubr.f32.gmra.mrb[0].mxu0 %v273
    %v945 = vpop.f32.mrb[0].mxu0
    %v946 = vadd.f32 0.0, %v945
    %v947 = vpop.f32.mrb[0].mxu0
    %948 = vmatprep.mubr.f32.mxu0 0.0
    %949 = vmatmul.mubr.f32.gmra.mrb[0].mxu0 %v276
    %v950 = vpop.f32.mrb[0].mxu0
    %v951 = vadd.f32 0.0, %v950
    %v952 = vpop.f32.mrb[0].mxu0
    %953 = vmatprep.mubr.f32.mxu0 0.0
    %954 = vmatmul.mubr.f32.gmra.mrb[0].mxu0 %v279
    %v955 = vpop.f32.mrb[0].mxu0
    %v956 = vadd.f32 0.0, %v955
    %v957 = vpop.f32.mrb[0].mxu0
    %958 = vmatprep.mubr.f32.mxu0 0.0
    %959 = vmatmul.mubr.f32.gmra.mrb[0].mxu0 %v282
    %v960 = vpop.f32.mrb[0].mxu0
    %v961 = vadd.f32 0.0, %v960
    %v962 = vpop.f32.mrb[0].mxu0
    %963 = vdwg.mxu0
    %vm964 = vcmask 261120
    %965 = vst.msk [vmem:[#allocation8] sm:$0xff] %vm964, %v351
    %966 = vst.msk [vmem:[#allocation8 + $0x8] sm:$0xff] %vm964, %v356
    %967 = vst.msk [vmem:[#allocation8 + $0x10] sm:$0xff] %vm964, %v361
    %968 = vst.msk [vmem:[#allocation8 + $0x18] sm:$0xff] %vm964, %v366
    %969 = vst.msk [vmem:[#allocation8 + $0x20] sm:$0xff] %vm964, %v436
    %970 = vst.msk [vmem:[#allocation8 + $0x28] sm:$0xff] %vm964, %v441
    %971 = vst.msk [vmem:[#allocation8 + $0x30] sm:$0xff] %vm964, %v446
    %972 = vst.msk [vmem:[#allocation8 + $0x38] sm:$0xff] %vm964, %v451
    %973 = vst.msk [vmem:[#allocation8 + $0x40] sm:$0xff] %vm964, %v521
    %974 = vst.msk [vmem:[#allocation8 + $0x48] sm:$0xff] %vm964, %v526
    %975 = vst.msk [vmem:[#allocation8 + $0x50] sm:$0xff] %vm964, %v531
    %976 = vst.msk [vmem:[#allocation8 + $0x58] sm:$0xff] %vm964, %v536
    %977 = vst.msk [vmem:[#allocation8 + $0x60] sm:$0xff] %vm964, %v606
    %978 = vst.msk [vmem:[#allocation8 + $0x68] sm:$0xff] %vm964, %v611
    %979 = vst.msk [vmem:[#allocation8 + $0x70] sm:$0xff] %vm964, %v616
    %980 = vst.msk [vmem:[#allocation8 + $0x78] sm:$0xff] %vm964, %v621
    %981 = vst.msk [vmem:[#allocation8 + $0x80] sm:$0xff] %vm964, %v691
    %982 = vst.msk [vmem:[#allocation8 + $0x88] sm:$0xff] %vm964, %v696
    %983 = vst.msk [vmem:[#allocation8 + $0x90] sm:$0xff] %vm964, %v701
    %984 = vst.msk [vmem:[#allocation8 + $0x98] sm:$0xff] %vm964, %v706
    %985 = vst.msk [vmem:[#allocation8 + $0xa0] sm:$0xff] %vm964, %v776
    %986 = vst.msk [vmem:[#allocation8 + $0xa8] sm:$0xff] %vm964, %v781
    %987 = vst.msk [vmem:[#allocation8 + $0xb0] sm:$0xff] %vm964, %v786
    %988 = vst.msk [vmem:[#allocation8 + $0xb8] sm:$0xff] %vm964, %v791
    %989 = vst.msk [vmem:[#allocation8 + $0xc0] sm:$0xff] %vm964, %v861
    %990 = vst.msk [vmem:[#allocation8 + $0xc8] sm:$0xff] %vm964, %v866
    %991 = vst.msk [vmem:[#allocation8 + $0xd0] sm:$0xff] %vm964, %v871
    %992 = vst.msk [vmem:[#allocation8 + $0xd8] sm:$0xff] %vm964, %v876
    %993 = vst.msk [vmem:[#allocation8 + $0xe0] sm:$0xff] %vm964, %v946
    %994 = vst.msk [vmem:[#allocation8 + $0xe8] sm:$0xff] %vm964, %v951
    %995 = vst.msk [vmem:[#allocation8 + $0xf0] sm:$0xff] %vm964, %v956
    %996 = vst.msk [vmem:[#allocation8 + $0xf8] sm:$0xff] %vm964, %v961
    // Predicated region
    $region26: #{interpolate_forward.1} parent=1 // pred_check
      _
    $region27: #{interpolate_forward.1} parent=1 // pred_check_branch
      %998 = sbr.rel (0) target = $region29
    $region28: #{interpolate_forward.1} parent=1 // pred_region
      %s1000 = ssub.s32 4096, 4096
      %1001 = vsyncadd [#allocation4], %s1000
      %s1002 = sshll.u32 [#allocation8], 4
      %s1003 = int_to_ptr.vmem [resolvable:$true] %s1002
      %1008 = dma.vmem_to_hbm [thread:$0]  %s1003, 4096, %s3, [#allocation4], 128, 128, 8
    $region29: #{interpolate_forward.1} parent=1 // pred_fallthru
      _
    // Predicated region
    $region30: #{interpolate_forward.1} parent=1 // pred_check
      _
    $region31: #{interpolate_forward.1} parent=1 // pred_check_branch
      %1010 = sbr.rel (0) target = $region33
    $region32: #{interpolate_forward.1} parent=1 // pred_region
      %1011 = dma.done [#allocation4], 4096
    $region33: #{interpolate_forward.1} parent=1 // pred_fallthru
      _
    %1012 = vsyncpa [#allocation3], 1
    %1013 = vsyncpa [#allocation6], 1
    %1014 = vsyncpa [#allocation4], 1

</llo_original>
